<compile_context>
chip_gen: v7x
topology: tpu7x:2x2x1
jax: 0.10.0
libtpu: 0.0.40
codegen_flags: <defaults>
</compile_context>

<pallas_src>
import functools

import jax
import jax.numpy as jnp
from jax import lax
from jax.experimental import pallas as pl
from jax.experimental.pallas import tpu as pltpu

EPS = 1e-5
NEG_SLOPE = 0.2


# ---------------------------------------------------------------------------
# Kernel
# ---------------------------------------------------------------------------
def _instance_norm_lrelu(acc_ref, o_ref, chunk):
    """InstanceNorm (biased var, eps=1e-5) + LeakyReLU(0.2) from the f32
    accumulator into o_ref.  Two-pass statistics; chunked over OHW so the
    f32 temporaries stay bounded even for large spatial extents."""
    ohw, tn = acc_ref.shape
    inv_n = 1.0 / ohw

    if chunk >= ohw:                           # single-chunk fast path
        conv = acc_ref[...]
        mean = jnp.sum(conv, axis=0, keepdims=True) * inv_n
        cen = conv - mean
        var = jnp.sum(cen * cen, axis=0, keepdims=True) * inv_n
        xhat = cen * lax.rsqrt(var + EPS)
        o_ref[...] = jnp.maximum(xhat, NEG_SLOPE * xhat).astype(o_ref.dtype)
        return

    n_chunks = ohw // chunk

    def _blk(c):
        idx = pl.multiple_of(c * chunk, chunk)
        return acc_ref[pl.ds(idx, chunk), :]

    # Pass 1: per-channel mean.
    s1 = lax.fori_loop(
        0, n_chunks,
        lambda c, s: s + jnp.sum(_blk(c), axis=0, keepdims=True),
        jnp.zeros((1, tn), jnp.float32))
    mean = s1 * inv_n

    # Pass 2: centered sum of squares (no E[x^2]-E[x]^2 cancellation).
    def _ssq(c, s):
        cen = _blk(c) - mean
        return s + jnp.sum(cen * cen, axis=0, keepdims=True)
    ssq = lax.fori_loop(0, n_chunks, _ssq, jnp.zeros((1, tn), jnp.float32))
    scale = lax.rsqrt(ssq * inv_n + EPS)

    # Pass 3: normalize + LeakyReLU + store, chunk by chunk.
    @pl.loop(0, n_chunks)
    def _(c):
        idx = pl.multiple_of(c * chunk, chunk)
        xhat = (acc_ref[pl.ds(idx, chunk), :] - mean) * scale
        o_ref[pl.ds(idx, chunk), :] = jnp.maximum(
            xhat, NEG_SLOPE * xhat).astype(o_ref.dtype)


def _disc_block_kernel(p_ref, w_ref, o_ref, acc_ref, *, kt, chunk):
    # p_ref:   (OHW, TK)  patches tile  (compute dtype)
    # w_ref:   (TK, TN)   weight tile   (compute dtype)
    # o_ref:   (OHW, TN)  output tile   (compute dtype)
    # acc_ref: (OHW, TN)  f32 accumulator (persists over the K grid axis)
    if kt == 1:
        # Common case (KT=1): no zero-init / accumulator RMW pass.
        acc_ref[...] = jnp.dot(p_ref[...], w_ref[...],
                               preferred_element_type=jnp.float32)
        _instance_norm_lrelu(acc_ref, o_ref, chunk)
    else:
        k = pl.program_id(2)

        @pl.when(k == 0)
        def _():
            acc_ref[...] = jnp.zeros_like(acc_ref)

        acc_ref[...] += jnp.dot(p_ref[...], w_ref[...],
                                preferred_element_type=jnp.float32)

        @pl.when(k == kt - 1)
        def _():
            _instance_norm_lrelu(acc_ref, o_ref, chunk)


# ---------------------------------------------------------------------------
# Wrapper helpers
# ---------------------------------------------------------------------------
def _round_up(v, m):
    return (v + m - 1) // m * m


def _vmem_capacity_bytes():
    try:
        return int(pltpu.get_tpu_info().vmem_capacity_bytes)
    except Exception:
        return 64 * 1024 * 1024            # conservative fallback (v7x-sized)


def _select_tiles(ohw, ckk, cout_pad, itemsize, budget):
    """Largest (TK over CKK, TN over COUT_PAD) whose per-step VMEM footprint
    (double-buffered patches/weights/output + f32 accumulator) fits `budget`.
    Prefer max TN (fewest channel tiles), then max TK (fewest RMW passes)."""
    def fits(tk, tn):
        patches = 2 * ohw * tk * itemsize        # double-buffered patch stream
        weights = 2 * tk * tn * itemsize         # double-buffered weight tile
        acc = ohw * tn * 4                       # f32 accumulator scratch
        outb = 2 * ohw * tn * itemsize           # double-buffered output block
        return patches + weights + acc + outb <= budget

    tn_cands = [cout_pad] + [t for t in (512, 256, 128)
                             if t < cout_pad and cout_pad % t == 0]
    if ckk % 128 == 0:
        tk_cands = [ckk] + [t for t in (2048, 1024, 512, 256, 128)
                            if t < ckk and ckk % t == 0]
    else:
        tk_cands = [ckk]                   # full extent is the only legal block

    for tn in tn_cands:
        for tk in tk_cands:
            if fits(tk, tn):
                return tk, tn
    return tk_cands[-1], tn_cands[-1]      # smallest legal tiles


def _choose_chunk(ohw):
    for ch in (1024, 512, 256, 128, 64, 32, 16, 8):
        if ohw % ch == 0:
            return ch
    return ohw


def _im2col_nhwc(x_pad, K, stride):
    """(N, Hp, Wp, C) reflect-padded NHWC -> (N, OH*OW, K*K*C) patches,
    tap-major (kh, kw) then channel.  Trace-time slicing only."""
    N, Hp, Wp, C = x_pad.shape
    OH = (Hp - K) // stride + 1
    OW = (Wp - K) // stride + 1
    taps = []
    for kh in range(K):
        for kw in range(K):
            taps.append(x_pad[:, kh:kh + stride * OH:stride,
                              kw:kw + stride * OW:stride, :])
    p = jnp.stack(taps, axis=3)                        # (N, OH, OW, K*K, C)
    return p.reshape(N, OH * OW, K * K * C), OH, OW


# ---------------------------------------------------------------------------
# Public entry point
# ---------------------------------------------------------------------------
@functools.partial(jax.jit,
                   static_argnames=("stride", "compute_dtype", "tile_override"))
def disc_block(x, weight, bias, stride, compute_dtype=jnp.bfloat16,
               tile_override=None):
    """x: (N, Cin, H, W);  weight: (Cout, Cin, 4, 4);  bias: (Cout,).

    Returns (N, Cout, OH, OW) in `compute_dtype`.
    `tile_override` (testing only): (TK, TN, CHUNK) to force tilings.
    """
    del bias  # exact no-op before InstanceNorm2d(affine=False); see header.

    N, Cin, H, W = x.shape
    Cout, _, K, _ = weight.shape

    # --- glue: cast FIRST, then NHWC reflect-pad + im2col (all in bf16) -----
    x_nhwc = jnp.transpose(x.astype(compute_dtype), (0, 2, 3, 1))
    x_pad = jnp.pad(x_nhwc, ((0, 0), (1, 1), (1, 1), (0, 0)), mode="reflect")
    patches, OH, OW = _im2col_nhwc(x_pad, K, stride)   # (N, OHW, K*K*Cin)
    OHW = OH * OW
    CKK = Cin * K * K

    # Lane-dense output: pad Cout to a multiple of 128 with zero weight cols.
    COUT_PAD = _round_up(Cout, 128)
    w_mat = jnp.transpose(weight, (2, 3, 1, 0)).reshape(CKK, Cout)
    w_mat = jnp.pad(w_mat.astype(compute_dtype), ((0, 0), (0, COUT_PAD - Cout)))

    # --- generation-portable VMEM budget & tile selection --------------------
    itemsize = jnp.dtype(compute_dtype).itemsize
    capacity = _vmem_capacity_bytes()
    vmem_limit = int(capacity * 0.85)       # leave headroom for Mosaic scratch
    budget = int(capacity * 0.70)           # budget used for tile selection

    if tile_override is not None:
        TK, TN, CHUNK = tile_override
    else:
        TK, TN = _select_tiles(OHW, CKK, COUT_PAD, itemsize, budget)
        CHUNK = _choose_chunk(OHW)
    KT = CKK // TK
    JT = COUT_PAD // TN

    kernel = functools.partial(_disc_block_kernel, kt=KT, chunk=CHUNK)

    out = pl.pallas_call(
        kernel,
        out_shape=jax.ShapeDtypeStruct((N, OHW, COUT_PAD), compute_dtype),
        grid_spec=pltpu.PrefetchScalarGridSpec(
            num_scalar_prefetch=0,
            grid=(N, JT, KT),                          # reduction axis last
            in_specs=[
                # leading batch dim squeezed -> 2-D kernel refs
                pl.BlockSpec((None, OHW, TK), lambda n, j, k: (n, 0, k)),
                pl.BlockSpec((TK, TN), lambda n, j, k: (k, j)),
            ],
            out_specs=pl.BlockSpec((None, OHW, TN), lambda n, j, k: (n, 0, j)),
            scratch_shapes=[pltpu.VMEM((OHW, TN), jnp.float32)],
        ),
        compiler_params=pltpu.CompilerParams(
            # batch & channel tiles are independent (megacore sharding);
            # the CKK reduction is sequential.
            dimension_semantics=("parallel", "parallel", "arbitrary"),
            vmem_limit_bytes=vmem_limit,
        ),
    )(patches, w_mat)

    # (N, OHW, COUT_PAD) -> (N, Cout, OH, OW)
    out = out[:, :, :Cout]
    return out.reshape(N, OH, OW, Cout).transpose(0, 3, 1, 2)


# ---------------------------------------------------------------------------
# Reference & self-test
# ---------------------------------------------------------------------------
def _reference(x, weight, bias, stride):
    # pure-JAX f32 reference: conv(+bias) -> InstanceNorm -> LeakyReLU
    x_pad = jnp.pad(x, ((0, 0), (0, 0), (1, 1), (1, 1)), mode="reflect")
    conv = lax.conv_general_dilated(
        x_pad, weight, window_strides=(stride, stride), padding="VALID",
        dimension_numbers=("NCHW", "OIHW", "NCHW"),
    ) + bias.reshape(1, -1, 1, 1)
    mean = jnp.mean(conv, axis=(2, 3), keepdims=True)
    var = jnp.mean((conv - mean) ** 2, axis=(2, 3), keepdims=True)
    xhat = (conv - mean) * lax.rsqrt(var + EPS)
    return jnp.where(xhat >= 0, xhat, NEG_SLOPE * xhat)


if __name__ == "__main__":
    key = jax.random.PRNGKey(0)

    def make_case(k, N, Cin, H, W, Cout, K=4):
        k_x, k_w, k_b = jax.random.split(k, 3)
        x = jax.random.normal(k_x, (N, Cin, H, W), dtype=jnp.float32)
        fan_in = Cin * K * K
        w = jax.random.normal(k_w, (Cout, Cin, K, K),
                              dtype=jnp.float32) / jnp.sqrt(fan_in)
        b = jax.random.normal(k_b, (Cout,), dtype=jnp.float32) * 0.1
        return x, w, b

    keys = jax.random.split(key, 4)
    cases = [
        # (tensors, stride, compute dtype, tile_override, tolerance)
        (make_case(keys[0], 2, 4, 16, 16, 8), 2, jnp.float32, None, 1e-4),
        (make_case(keys[1], 2, 4, 16, 16, 8), 2, jnp.bfloat16, None, 5e-2),
        # stride=1, CKK=1024: budget-driven selection keeps KT=1 here
        (make_case(keys[2], 2, 64, 16, 16, 32), 1, jnp.bfloat16, None, 5e-2),
        # force the K-split (KT=2), channel-tile (JT=2) and chunked-epilogue
        # code paths that the big CycleGAN layers would hit
        (make_case(keys[3], 2, 64, 16, 16, 256), 2, jnp.bfloat16,
         (512, 128, 32), 5e-2),
    ]

    for (x, w, b), stride, cdt, tiles, tol in cases:
        out = disc_block(x, w, b, stride, compute_dtype=cdt,
                         tile_override=tiles)
        out = jax.block_until_ready(out)
        ref = _reference(x, w, b, stride)

        N, Cin, H, W = x.shape
        Cout = w.shape[0]
        OH = (H + 2 - 4) // stride + 1
        assert out.shape == (N, Cout, OH, OH), out.shape
        out_f32 = out.astype(jnp.float32)
        max_err = float(jnp.max(jnp.abs(out_f32 - ref)))
        assert jnp.allclose(out_f32, ref, rtol=tol, atol=tol), (
            f"mismatch vs reference (stride={stride}, dtype={cdt}, "
            f"tiles={tiles}, max_err={max_err})")

    print("KERNEL_OK")
</pallas_src>

<mosaic_0001>
module attributes {stable_mosaic.version = 11 : i64} {
  func.func @_disc_block_kernel(%arg0: i32, %arg1: i32, %arg2: i32, %arg3: memref<1x64x64xf32, #tpu.memory_space<vmem>>, %arg4: memref<64x128xf32, #tpu.memory_space<vmem>>, %arg5: memref<1x64x128xf32, #tpu.memory_space<vmem>>, %arg6: memref<64x128xf32, #tpu.memory_space<vmem>>) attributes {dimension_semantics = [#tpu.dimension_semantics<parallel>, #tpu.dimension_semantics<parallel>, #tpu.dimension_semantics<arbitrary>], iteration_bounds = array<i64: 2, 1, 1>, scalar_prefetch = 0 : i64, scratch_operands = 1 : i64, tpu.core_type = #tpu.core_type<tc>, window_params = [{transform_indices = @transform_0, window_bounds = array<i64: 1, 64, 64>}, {transform_indices = @transform_1, window_bounds = array<i64: 64, 128>}, {transform_indices = @transform_2, window_bounds = array<i64: 1, 64, 128>}]} {
    %c0 = arith.constant 0 : index
    %c0_0 = arith.constant 0 : index
    %c0_1 = arith.constant 0 : index
    %0 = vector.load %arg3[%c0, %c0_0, %c0_1] : memref<1x64x64xf32, #tpu.memory_space<vmem>>, vector<1x64x64xf32>
    %1 = vector.shape_cast %0 : vector<1x64x64xf32> to vector<64x64xf32>
    %c0_2 = arith.constant 0 : index
    %c0_3 = arith.constant 0 : index
    %2 = vector.load %arg4[%c0_2, %c0_3] : memref<64x128xf32, #tpu.memory_space<vmem>>, vector<64x128xf32>
    %cst = arith.constant dense<0.000000e+00> : vector<64x128xf32>
    %3 = tpu.matmul %1, %2, %cst {dimension_numbers = #tpu.dot_dimension_numbers<[1], [0], [0], [1], [0, 0, 1, 1], [], []>} : vector<64x64xf32>, vector<64x128xf32>, vector<64x128xf32> -> vector<64x128xf32>
    %c0_4 = arith.constant 0 : index
    %c0_5 = arith.constant 0 : index
    %4 = vector.load %arg6[%c0_4, %c0_5] : memref<64x128xf32, #tpu.memory_space<vmem>>, vector<64x128xf32>
    tpu.vector_store %arg6[%c0_4, %c0_5], %3 {strides = array<i32>} : memref<64x128xf32, #tpu.memory_space<vmem>>, vector<64x128xf32>,
    %c0_6 = arith.constant 0 : index
    %c0_7 = arith.constant 0 : index
    %5 = vector.load %arg6[%c0_6, %c0_7] : memref<64x128xf32, #tpu.memory_space<vmem>>, vector<64x128xf32>
    %cst_8 = arith.constant dense<0.000000e+00> : vector<128xf32>
    %6 = vector.multi_reduction <add>, %5, %cst_8 [0] : vector<64x128xf32> to vector<128xf32>
    %7 = vector.shape_cast %6 : vector<128xf32> to vector<1x128xf32>
    %cst_9 = arith.constant 1.562500e-02 : f32
    %8 = vector.broadcast %cst_9 : f32 to vector<1x128xf32>
    %9 = arith.mulf %7, %8 : vector<1x128xf32>
    %10 = vector.broadcast %9 : vector<1x128xf32> to vector<64x128xf32>
    %11 = arith.subf %5, %10 : vector<64x128xf32>
    %12 = arith.mulf %11, %11 : vector<64x128xf32>
    %cst_10 = arith.constant dense<0.000000e+00> : vector<128xf32>
    %13 = vector.multi_reduction <add>, %12, %cst_10 [0] : vector<64x128xf32> to vector<128xf32>
    %14 = vector.shape_cast %13 : vector<128xf32> to vector<1x128xf32>
    %cst_11 = arith.constant 1.562500e-02 : f32
    %15 = vector.broadcast %cst_11 : f32 to vector<1x128xf32>
    %16 = arith.mulf %14, %15 : vector<1x128xf32>
    %cst_12 = arith.constant 9.99999974E-6 : f32
    %17 = vector.broadcast %cst_12 : f32 to vector<1x128xf32>
    %18 = arith.addf %16, %17 : vector<1x128xf32>
    %19 = math.rsqrt %18 : vector<1x128xf32>
    %20 = vector.broadcast %19 : vector<1x128xf32> to vector<64x128xf32>
    %21 = arith.mulf %11, %20 : vector<64x128xf32>
    %cst_13 = arith.constant 2.000000e-01 : f32
    %22 = vector.broadcast %cst_13 : f32 to vector<64x128xf32>
    %23 = arith.mulf %22, %21 : vector<64x128xf32>
    %24 = arith.maximumf %21, %23 : vector<64x128xf32>
    %c0_14 = arith.constant 0 : index
    %c0_15 = arith.constant 0 : index
    %c0_16 = arith.constant 0 : index
    %25 = vector.load %arg5[%c0_14, %c0_15, %c0_16] : memref<1x64x128xf32, #tpu.memory_space<vmem>>, vector<1x64x128xf32>
    %26 = vector.shape_cast %25 : vector<1x64x128xf32> to vector<64x128xf32>
    %27 = vector.shape_cast %24 : vector<64x128xf32> to vector<1x64x128xf32>
    tpu.vector_store %arg5[%c0_14, %c0_15, %c0_16], %27 {strides = array<i32>} : memref<1x64x128xf32, #tpu.memory_space<vmem>>, vector<1x64x128xf32>,
    return
  }
  func.func @transform_0(%arg0: i32, %arg1: i32, %arg2: i32) -> (i32, i32, i32) {
    %c0_i32 = arith.constant 0 : i32
    %c0_i32_0 = arith.constant 0 : i32
    return %arg0, %c0_i32, %arg2 : i32, i32, i32
  }
  func.func @transform_1(%arg0: i32, %arg1: i32, %arg2: i32) -> (i32, i32) {
    %c0_i32 = arith.constant 0 : i32
    return %arg2, %arg1 : i32, i32
  }
  func.func @transform_2(%arg0: i32, %arg1: i32, %arg2: i32) -> (i32, i32, i32) {
    %c0_i32 = arith.constant 0 : i32
    %c0_i32_0 = arith.constant 0 : i32
    return %arg0, %c0_i32, %arg1 : i32, i32, i32
  }
}

</mosaic_0001>

<llo_original>
// kernel: disc_block.1
$region0: #{disc_block.1}
  #allocation0 [shape = 'u32[]', space=smem, size = 0x4, offset = 0x4, fixed_abs, tag = 'smem constant byte address 0x4 - core index']
  #allocation1 [shape = 'u32[144,128]{1,0:T(1,128)}', space=vmem, size = 0x12000, scoped, tag = 'internal scratch']
  #allocation2 [shape = 'f32[64,128]{1,0:T(8,128)}', space=vmem, size = 0x8000, scoped, tag = 'scratch operand']
  %s0 = inlined_call_operand.vmem [shape: f32[2,64,64], index: 0, kind: input, shape index: {}]
  %s1 = inlined_call_operand.vmem [shape: f32[64,128], index: 1, kind: input, shape index: {}]
  %s2 = inlined_call_operand.vmem [shape: f32[2,64,128], index: 2, kind: output, shape index: {}]
  %s3 = sld [smem:[#allocation0]]
  $region41: #{disc_block.1} parent=0
    _
  %s5 = ssub.s32 1, %s3
  %s6 = scalar_select 0, %s5, %s3
  loop: start=0, step=1, limit=4
  $region2: #{disc_block.1} parent=0 // loop_pre_header
    _
  $region3: #{disc_block.1} parent=0 // loop_header
    %s8 = sphi 0, %s12
    %p9 = scmp.ge.s32.totalorder %s8, 4
    %s15 = sphi 0, %s34
    %s16 = sphi 0, %s30
    %s17 = sphi 0, %s26
    %s18 = sphi 0, %s15
    %s19 = sphi 0, %s16
    %s20 = sphi 0, %s17
    %s21 = sphi 0, %s18
    %s22 = sphi 0, %s19
    %s23 = sphi 0, %s20
    %s39 = sphi 0, %s41
    %s42 = sphi 0, %s39
    %s43 = sphi 0, %s42
    %s59 = sphi 0, %s43
    %s67 = sphi 0, %s69
    %s70 = sphi 0, %s67
    %s71 = sphi 0, %s70
    %s87 = sphi 0, %s71
    %s95 = sphi 0, %s97
    %s98 = sphi 0, %s95
    %s99 = sphi 0, %s98
    %s115 = sphi 0, %s99
  $region4: #{disc_block.1} parent=0 // loop_header_branch
    %11 = sbr.rel (%p9) target = $region8
  $region5: #{disc_block.1} parent=0 // loop_body
    %s13 = ssub.s32 %s8, 1
    %s14 = ssub.s32 %s8, 2
    %s24 = sadd.s32 1, %s17
    %p25 = scmp.ge.s32.totalorder %s24, 1
    %s26 = scalar_select %p25, 0, %s24
    %s27 = sadd.s32 1, %s16
    %s28 = scalar_select %p25, %s27, %s16
    %p29 = scmp.ge.s32.totalorder %s28, 1
    %s30 = scalar_select %p29, 0, %s28
    %s31 = sadd.s32 1, %s15
    %s32 = scalar_select %p29, %s31, %s15
    %p33 = scmp.ge.s32.totalorder %s32, 2
    %s34 = scalar_select %p33, 0, %s32
    %s35 = ssub.s32 %s15, %s34
    %s36 = ssub.s32 %s17, %s26
    %s37 = sor.u32 %s35, %s36
    %p38 = scmp.eq.s32.totalorder %s37, 0
    %s40 = sadd.s32 %s39, 1
    %s41 = scalar_select %p38, %s39, %s40
    %p44 = pneg %p38
    %p45 = scmp.eq.s32.totalorder %s8, 1
    %p46 = por %p44, %p45
    %p47 = scmp.ne.s32.totalorder %s39, %s42
    %p48 = scmp.eq.s32.totalorder %s8, 0
    %p49 = por %p47, %p48
    %p50 = scmp.ne.s32.totalorder %s39, %s42
    %p51 = scmp.eq.s32.totalorder %s13, 1
    %p52 = por %p50, %p51
    %p53 = scmp.ne.s32.totalorder %s42, %s43
    %p54 = scmp.eq.s32.totalorder %s13, 0
    %p55 = por %p53, %p54
    %p56 = scmp.ne.s32.totalorder %s42, %s43
    %p57 = scmp.eq.s32.totalorder %s14, 1
    %p58 = por %p56, %p57
    %p60 = scmp.ne.s32.totalorder %s43, %s59
    %p61 = scmp.eq.s32.totalorder %s14, 0
    %p62 = por %p60, %p61
    %s63 = ssub.s32 %s17, %s26
    %s64 = ssub.s32 %s16, %s30
    %s65 = sor.u32 %s63, %s64
    %p66 = scmp.eq.s32.totalorder %s65, 0
    %s68 = sadd.s32 %s67, 1
    %s69 = scalar_select %p66, %s67, %s68
    %p72 = pneg %p66
    %p73 = scmp.eq.s32.totalorder %s8, 1
    %p74 = por %p72, %p73
    %p75 = scmp.ne.s32.totalorder %s67, %s70
    %p76 = scmp.eq.s32.totalorder %s8, 0
    %p77 = por %p75, %p76
    %p78 = scmp.ne.s32.totalorder %s67, %s70
    %p79 = scmp.eq.s32.totalorder %s13, 1
    %p80 = por %p78, %p79
    %p81 = scmp.ne.s32.totalorder %s70, %s71
    %p82 = scmp.eq.s32.totalorder %s13, 0
    %p83 = por %p81, %p82
    %p84 = scmp.ne.s32.totalorder %s70, %s71
    %p85 = scmp.eq.s32.totalorder %s14, 1
    %p86 = por %p84, %p85
    %p88 = scmp.ne.s32.totalorder %s71, %s87
    %p89 = scmp.eq.s32.totalorder %s14, 0
    %p90 = por %p88, %p89
    %s91 = ssub.s32 %s15, %s34
    %s92 = ssub.s32 %s16, %s30
    %s93 = sor.u32 %s91, %s92
    %p94 = scmp.eq.s32.totalorder %s93, 0
    %s96 = sadd.s32 %s95, 1
    %s97 = scalar_select %p94, %s95, %s96
    %p100 = pneg %p94
    %p101 = scmp.eq.s32.totalorder %s8, 1
    %p102 = por %p100, %p101
    %p103 = scmp.ne.s32.totalorder %s95, %s98
    %p104 = scmp.eq.s32.totalorder %s8, 0
    %p105 = por %p103, %p104
    %p106 = scmp.ne.s32.totalorder %s95, %s98
    %p107 = scmp.eq.s32.totalorder %s13, 1
    %p108 = por %p106, %p107
    %p109 = scmp.ne.s32.totalorder %s98, %s99
    %p110 = scmp.eq.s32.totalorder %s13, 0
    %p111 = por %p109, %p110
    %p112 = scmp.ne.s32.totalorder %s98, %s99
    %p113 = scmp.eq.s32.totalorder %s14, 1
    %p114 = por %p112, %p113
    %p116 = scmp.ne.s32.totalorder %s99, %s115
    %p117 = scmp.eq.s32.totalorder %s14, 0
    %p118 = por %p116, %p117
    %p119 = scmp.le.s32.totalorder 1, %s8
    %p120 = scmp.lt.s32.totalorder %s8, 3
    %p121 = pnand %p119, %p120
    %p122 = pneg %p121
    // Predicated region
    $region9: #{disc_block.1} parent=5 // pred_check
      _
    $region10: #{disc_block.1} parent=5 // pred_check_branch
      %124 = sbr.rel (%p121) target = $region12
    $region11: #{disc_block.1} parent=5 // pred_region
      %s125 = ssub.s32 %s8, 1
      // Predicated region
      $region13: #{disc_block.1} parent=11 // pred_check
        %p126 = pneg %p83
      $region14: #{disc_block.1} parent=11 // pred_check_branch
        %128 = sbr.rel (%p126) target = $region16
      $region15: #{disc_block.1} parent=11 // pred_region
        %s129 = smul.u32 8, %s20
        %p130 = scmp.lt.s32.totalorder %s129, 7
        %s131 = scalar_select %p130, %s129, 7
        %p132 = scmp.lt.s32.totalorder %s19, 0
        %s133 = scalar_select %p132, %s19, 0
        %s134 = sadd.s32 %s133, %s131
        %s135 = smul.addr %s134, 8
        %s136 = scalar_lea.vmem %s1, %s135
        %s137 = smul.u32 8, %s20
      $region16: #{disc_block.1} parent=11 // pred_fallthru
        _
    $region12: #{disc_block.1} parent=5 // pred_fallthru
      _
    %p138 = scmp.lt.s32.totalorder %s8, 2
    // Predicated region
    $region17: #{disc_block.1} parent=5 // pred_check
      %p139 = pneg %p138
    $region18: #{disc_block.1} parent=5 // pred_check_branch
      %141 = sbr.rel (%p139) target = $region20
    $region19: #{disc_block.1} parent=5 // pred_region
      // Predicated region
      $region21: #{disc_block.1} parent=19 // pred_check
        %p142 = pneg %p49
      $region22: #{disc_block.1} parent=19 // pred_check_branch
        %144 = sbr.rel (%p142) target = $region24
      $region23: #{disc_block.1} parent=19 // pred_region
        %p145 = scmp.lt.s32.totalorder %s15, 1
        %s146 = scalar_select %p145, %s15, 1
        %p147 = scmp.lt.s32.totalorder %s17, 0
        %s148 = scalar_select %p147, %s17, 0
        %s149 = smul.addr %s146, 8
        %s150 = sadd.s32 %s148, %s149
        %s151 = smul.addr %s150, 8
        %s152 = scalar_lea.vmem %s0, %s151
      $region24: #{disc_block.1} parent=19 // pred_fallthru
        _
    $region20: #{disc_block.1} parent=5 // pred_fallthru
      _
    %p153 = scmp.le.s32.totalorder 1, %s8
    %p154 = scmp.lt.s32.totalorder %s8, 3
    %p155 = pnand %p153, %p154
    %p156 = pneg %p155
    // Predicated region
    $region25: #{disc_block.1} parent=5 // pred_check
      _
    $region26: #{disc_block.1} parent=5 // pred_check_branch
      %158 = sbr.rel (%p155) target = $region28
    $region27: #{disc_block.1} parent=5 // pred_region
      %s159 = ssub.s32 %s8, 1
      %p160 = scmp.lt.s32.totalorder %s18, 1
      %s161 = scalar_select %p160, %s18, 1
      %p162 = scmp.lt.s32.totalorder %s20, 0
      %s163 = scalar_select %p162, %s20, 0
      %s164 = smul.addr %s161, 8
      %s165 = sadd.s32 %s163, %s164
      %s166 = smul.addr %s165, 8
      %s167 = scalar_lea.vmem %s0, %s166
      %p168 = pneg %p55
      %p169 = pneg %p52
      %s170 = smul.u32 8, %s20
      %p171 = scmp.lt.s32.totalorder %s170, 7
      %s172 = scalar_select %p171, %s170, 7
      %p173 = scmp.lt.s32.totalorder %s19, 0
      %s174 = scalar_select %p173, %s19, 0
      %s175 = sadd.s32 %s174, %s172
      %s176 = smul.addr %s175, 8
      %s177 = scalar_lea.vmem %s1, %s176
      %p178 = pneg %p83
      %p179 = pneg %p80
      %p180 = pneg %p111
      %p181 = pneg %p108
      %p182 = scmp.lt.s32.totalorder %s18, 1
      %s183 = scalar_select %p182, %s18, 1
      %p184 = scmp.lt.s32.totalorder %s19, 0
      %s185 = scalar_select %p184, %s19, 0
      %s186 = smul.addr %s183, 8
      %s187 = sadd.s32 %s185, %s186
      %s188 = smul.addr %s187, 8
      %s189 = scalar_lea.vmem %s2, %s188
      %p190 = scmp.lt.s32.totalorder %s18, 1
      %s191 = scalar_select %p190, %s18, 1
      %p192 = scmp.lt.s32.totalorder %s20, 0
      %s193 = scalar_select %p192, %s20, 0
      %s194 = smul.addr %s191, 8
      %s195 = sadd.s32 %s193, %s194
      %s196 = smul.addr %s195, 8
      %s197 = scalar_lea.vmem %s0, %s196
      %s198 = smul.u32 8, %s20
      %p199 = scmp.lt.s32.totalorder %s198, 7
      %s200 = scalar_select %p199, %s198, 7
      %p201 = scmp.lt.s32.totalorder %s19, 0
      %s202 = scalar_select %p201, %s19, 0
      %s203 = sadd.s32 %s202, %s200
      %s204 = smul.addr %s203, 8
      %s205 = scalar_lea.vmem %s1, %s204
      %s206 = smul.u32 8, %s20
      %p207 = scmp.lt.s32.totalorder %s18, 1
      %s208 = scalar_select %p207, %s18, 1
      %p209 = scmp.lt.s32.totalorder %s19, 0
      %s210 = scalar_select %p209, %s19, 0
      %s211 = smul.addr %s208, 8
      %s212 = sadd.s32 %s210, %s211
      %s213 = smul.addr %s212, 8
      %s214 = scalar_lea.vmem %s2, %s213
      %v215 = vld [vmem:[%s197] sm:$0xff]
      %v216 = vld [vmem:[%s197 + $0x8] sm:$0xff]
      %v217 = vld [vmem:[%s197 + $0x10] sm:$0xff]
      %v218 = vld [vmem:[%s197 + $0x18] sm:$0xff]
      %v219 = vld [vmem:[%s197 + $0x20] sm:$0xff]
      %v220 = vld [vmem:[%s197 + $0x28] sm:$0xff]
      %v221 = vld [vmem:[%s197 + $0x30] sm:$0xff]
      %v222 = vld [vmem:[%s197 + $0x38] sm:$0xff]
      %v223 = vld [vmem:[%s205] sm:$0xff]
      %v224 = vld [vmem:[%s205 + $0x8] sm:$0xff]
      %v225 = vld [vmem:[%s205 + $0x10] sm:$0xff]
      %v226 = vld [vmem:[%s205 + $0x18] sm:$0xff]
      %v227 = vld [vmem:[%s205 + $0x20] sm:$0xff]
      %v228 = vld [vmem:[%s205 + $0x28] sm:$0xff]
      %v229 = vld [vmem:[%s205 + $0x30] sm:$0xff]
      %v230 = vld [vmem:[%s205 + $0x38] sm:$0xff]
      %vm231 = vcmask 523264
      %v233 = vsel %vm231, %v215, 0
      %v236 = vsel %vm231, %v216, 0
      %v239 = vsel %vm231, %v217, 0
      %v242 = vsel %vm231, %v218, 0
      %v245 = vsel %vm231, %v219, 0
      %v248 = vsel %vm231, %v220, 0
      %v251 = vsel %vm231, %v221, 0
      %v254 = vsel %vm231, %v222, 0
      %256 = vmatprep.subr.mxu0 0.0
      %257 = vmatpush1.msra.mxu0 %v223
      %258 = vmatprep.subr.mxu0 0.0
      %259 = vmatpush1.msra.mxu0 %v224
      %260 = vmatprep.subr.mxu0 0.0
      %261 = vmatpush1.msra.mxu0 %v225
      %262 = vmatprep.subr.mxu0 0.0
      %263 = vmatpush1.msra.mxu0 %v226
      %264 = vmatprep.subr.mxu0 0.0
      %265 = vmatpush1.msra.mxu0 %v227
      %266 = vmatprep.subr.mxu0 0.0
      %267 = vmatpush1.msra.mxu0 %v228
      %268 = vmatprep.subr.mxu0 0.0
      %269 = vmatpush1.msra.mxu0 %v229
      %270 = vmatprep.subr.mxu0 0.0
      %271 = vmatpush1.msra.mxu0 %v230
      %272 = vmatprep.subr.mxu0 0.0
      %273 = vmatpush1.msra.mxu0 0.0
      %274 = vmatprep.subr.mxu0 0.0
      %275 = vmatpush1.msra.mxu0 0.0
      %276 = vmatprep.subr.mxu0 0.0
      %277 = vmatpush1.msra.mxu0 0.0
      %278 = vmatprep.subr.mxu0 0.0
      %279 = vmatpush1.msra.mxu0 0.0
      %280 = vmatprep.subr.mxu0 0.0
      %281 = vmatpush1.msra.mxu0 0.0
      %282 = vmatprep.subr.mxu0 0.0
      %283 = vmatpush1.msra.mxu0 0.0
      %284 = vmatprep.subr.mxu0 0.0
      %285 = vmatpush1.msra.mxu0 0.0
      %286 = vmatprep.subr.mxu0 0.0
      %287 = vmatpush1.msra.mxu0 0.0
      %288 = vmatprep.subr.mxu0 0.0
      %289 = vmatpush1.msra.mxu0 0.0
      %290 = vmatprep.subr.mxu0 0.0
      %291 = vmatpush1.msra.mxu0 0.0
      %292 = vmatprep.subr.mxu0 0.0
      %293 = vmatpush1.msra.mxu0 0.0
      %294 = vmatprep.subr.mxu0 0.0
      %295 = vmatpush1.msra.mxu0 0.0
      %296 = vmatprep.subr.mxu0 0.0
      %297 = vmatpush1.msra.mxu0 0.0
      %298 = vmatprep.subr.mxu0 0.0
      %299 = vmatpush1.msra.mxu0 0.0
      %300 = vmatprep.subr.mxu0 0.0
      %301 = vmatpush1.msra.mxu0 0.0
      %302 = vmatprep.subr.mxu0 0.0
      %303 = vmatpush1.msra.mxu0 0.0
      %304 = vmatprep.subr.mxu0 0.0
      %305 = vmatpush1.msra.mxu0 0.0
      %306 = vmatprep.subr.mxu0 0.0
      %307 = vmatpush1.msra.mxu0 0.0
      %308 = vmatprep.subr.mxu0 0.0
      %309 = vmatpush1.msra.mxu0 0.0
      %310 = vmatprep.subr.mxu0 0.0
      %311 = vmatpush1.msra.mxu0 0.0
      %312 = vmatprep.subr.mxu0 0.0
      %313 = vmatpush1.msra.mxu0 0.0
      %314 = vmatprep.subr.mxu0 0.0
      %315 = vmatpush1.msra.mxu0 0.0
      %316 = vmatprep.subr.mxu0 0.0
      %317 = vmatpush1.msra.mxu0 0.0
      %318 = vmatprep.subr.mxu0 0.0
      %319 = vmatpush1.msra.mxu0 0.0
      %320 = vmatprep.mubr.f32.mxu0 0.0
      %321 = vmatmul.mubr.f32.gmra.mrb[0].mxu0 %v233
      %v322 = vpop.f32.mrb[0].mxu0
      %v323 = vadd.f32 0.0, %v322
      %v324 = vpop.f32.mrb[0].mxu0
      %325 = vmatprep.mubr.f32.mxu0 0.0
      %326 = vmatmul.mubr.f32.gmra.mrb[0].mxu0 %v236
      %v327 = vpop.f32.mrb[0].mxu0
      %v328 = vadd.f32 0.0, %v327
      %v329 = vpop.f32.mrb[0].mxu0
      %330 = vmatprep.mubr.f32.mxu0 0.0
      %331 = vmatmul.mubr.f32.gmra.mrb[0].mxu0 %v239
      %v332 = vpop.f32.mrb[0].mxu0
      %v333 = vadd.f32 0.0, %v332
      %v334 = vpop.f32.mrb[0].mxu0
      %335 = vmatprep.mubr.f32.mxu0 0.0
      %336 = vmatmul.mubr.f32.gmra.mrb[0].mxu0 %v242
      %v337 = vpop.f32.mrb[0].mxu0
      %v338 = vadd.f32 0.0, %v337
      %v339 = vpop.f32.mrb[0].mxu0
      %340 = vmatprep.mubr.f32.mxu0 0.0
      %341 = vmatmul.mubr.f32.gmra.mrb[0].mxu0 %v245
      %v342 = vpop.f32.mrb[0].mxu0
      %v343 = vadd.f32 0.0, %v342
      %v344 = vpop.f32.mrb[0].mxu0
      %345 = vmatprep.mubr.f32.mxu0 0.0
      %346 = vmatmul.mubr.f32.gmra.mrb[0].mxu0 %v248
      %v347 = vpop.f32.mrb[0].mxu0
      %v348 = vadd.f32 0.0, %v347
      %v349 = vpop.f32.mrb[0].mxu0
      %350 = vmatprep.mubr.f32.mxu0 0.0
      %351 = vmatmul.mubr.f32.gmra.mrb[0].mxu0 %v251
      %v352 = vpop.f32.mrb[0].mxu0
      %v353 = vadd.f32 0.0, %v352
      %v354 = vpop.f32.mrb[0].mxu0
      %355 = vmatprep.mubr.f32.mxu0 0.0
      %356 = vmatmul.mubr.f32.gmra.mrb[0].mxu0 %v254
      %v357 = vpop.f32.mrb[0].mxu0
      %v358 = vadd.f32 0.0, %v357
      %v359 = vpop.f32.mrb[0].mxu0
      %360 = vdwg.mxu0
      %361 = vst [vmem:[#allocation2] sm:$0xff] %v323
      %362 = vst [vmem:[#allocation2 + $0x8] sm:$0xff] %v328
      %363 = vst [vmem:[#allocation2 + $0x10] sm:$0xff] %v333
      %364 = vst [vmem:[#allocation2 + $0x18] sm:$0xff] %v338
      %365 = vst [vmem:[#allocation2 + $0x20] sm:$0xff] %v343
      %366 = vst [vmem:[#allocation2 + $0x28] sm:$0xff] %v348
      %367 = vst [vmem:[#allocation2 + $0x30] sm:$0xff] %v353
      %368 = vst [vmem:[#allocation2 + $0x38] sm:$0xff] %v358
      %v369 = vld [vmem:[#allocation2] sm:$0xff]
      %v370 = vld [vmem:[#allocation2 + $0x8] sm:$0xff]
      %v371 = vld [vmem:[#allocation2 + $0x10] sm:$0xff]
      %v372 = vld [vmem:[#allocation2 + $0x18] sm:$0xff]
      %v373 = vld [vmem:[#allocation2 + $0x20] sm:$0xff]
      %v374 = vld [vmem:[#allocation2 + $0x28] sm:$0xff]
      %v375 = vld [vmem:[#allocation2 + $0x30] sm:$0xff]
      %v376 = vld [vmem:[#allocation2 + $0x38] sm:$0xff]
      %v377 = vadd.f32 %v369, %v370
      %v378 = vadd.f32 %v377, %v371
      %v379 = vadd.f32 %v378, %v372
      %v380 = vadd.f32 %v379, %v373
      %v381 = vadd.f32 %v380, %v374
      %v382 = vadd.f32 %v381, %v375
      %v383 = vadd.f32 %v382, %v376
      %v384 = vrot.slane %v383, 4
      %v385 = vadd.f32 %v383, %v384
      %v386 = vrot.slane %v385, 2
      %v387 = vadd.f32 %v385, %v386
      %v388 = vrot.slane %v387, 1
      %v389 = vadd.f32 %v387, %v388
      %v390 = vmul.f32 %v389, 0.015625
      %v391 = vsub.f32 %v369, %v390
      %v392 = vsub.f32 %v370, %v390
      %v393 = vsub.f32 %v371, %v390
      %v394 = vsub.f32 %v372, %v390
      %v395 = vsub.f32 %v373, %v390
      %v396 = vsub.f32 %v374, %v390
      %v397 = vsub.f32 %v375, %v390
      %v398 = vsub.f32 %v376, %v390
      %v399 = vmul.f32 %v391, %v391
      %v400 = vmul.f32 %v392, %v392
      %v401 = vmul.f32 %v393, %v393
      %v402 = vmul.f32 %v394, %v394
      %v403 = vmul.f32 %v395, %v395
      %v404 = vmul.f32 %v396, %v396
      %v405 = vmul.f32 %v397, %v397
      %v406 = vmul.f32 %v398, %v398
      %v407 = vadd.f32 %v399, %v400
      %v408 = vadd.f32 %v407, %v401
      %v409 = vadd.f32 %v408, %v402
      %v410 = vadd.f32 %v409, %v403
      %v411 = vadd.f32 %v410, %v404
      %v412 = vadd.f32 %v411, %v405
      %v413 = vadd.f32 %v412, %v406
      %v414 = vrot.slane %v413, 4
      %v415 = vadd.f32 %v413, %v414
      %v416 = vrot.slane %v415, 2
      %v417 = vadd.f32 %v415, %v416
      %v418 = vrot.slane %v417, 1
      %v419 = vadd.f32 %v417, %v418
      %v420 = vmul.f32 %v419, 0.015625
      %v421 = vadd.f32 %v420, 1e-05
      %v422 = vrsqrt.pop %v421
      %v423 = vmul.f32 %v391, %v422
      %v424 = vmul.f32 %v392, %v422
      %v425 = vmul.f32 %v393, %v422
      %v426 = vmul.f32 %v394, %v422
      %v427 = vmul.f32 %v395, %v422
      %v428 = vmul.f32 %v396, %v422
      %v429 = vmul.f32 %v397, %v422
      %v430 = vmul.f32 %v398, %v422
      %v431 = vmul.f32 %v423, 0.2
      %v432 = vmul.f32 %v424, 0.2
      %v433 = vmul.f32 %v425, 0.2
      %v434 = vmul.f32 %v426, 0.2
      %v435 = vmul.f32 %v427, 0.2
      %v436 = vmul.f32 %v428, 0.2
      %v437 = vmul.f32 %v429, 0.2
      %v438 = vmul.f32 %v430, 0.2
      %v439 = vmax.f32 %v423, %v431
      %v440 = vmax.f32 %v424, %v432
      %v441 = vmax.f32 %v425, %v433
      %v442 = vmax.f32 %v426, %v434
      %v443 = vmax.f32 %v427, %v435
      %v444 = vmax.f32 %v428, %v436
      %v445 = vmax.f32 %v429, %v437
      %v446 = vmax.f32 %v430, %v438
      %447 = vst [vmem:[%s214] sm:$0xff] %v439
      %448 = vst [vmem:[%s214 + $0x8] sm:$0xff] %v440
      %449 = vst [vmem:[%s214 + $0x10] sm:$0xff] %v441
      %450 = vst [vmem:[%s214 + $0x18] sm:$0xff] %v442
      %451 = vst [vmem:[%s214 + $0x20] sm:$0xff] %v443
      %452 = vst [vmem:[%s214 + $0x28] sm:$0xff] %v444
      %453 = vst [vmem:[%s214 + $0x30] sm:$0xff] %v445
      %454 = vst [vmem:[%s214 + $0x38] sm:$0xff] %v446
      %p455 = scmp.lt.s32.totalorder %s18, 1
      %s456 = scalar_select %p455, %s18, 1
      %p457 = scmp.lt.s32.totalorder %s19, 0
      %s458 = scalar_select %p457, %s19, 0
      %s459 = smul.addr %s456, 8
      %s460 = sadd.s32 %s458, %s459
      %s461 = smul.addr %s460, 8
      %s462 = scalar_lea.vmem %s2, %s461
      // Predicated region
      $region29: #{disc_block.1} parent=27 // pred_check
        %p463 = pneg %p108
      $region30: #{disc_block.1} parent=27 // pred_check_branch
        %465 = sbr.rel (%p463) target = $region32
      $region31: #{disc_block.1} parent=27 // pred_region
        _
      $region32: #{disc_block.1} parent=27 // pred_fallthru
        _
    $region28: #{disc_block.1} parent=5 // pred_fallthru
      _
    %p466 = scmp.le.s32.totalorder 2, %s8
    // Predicated region
    $region33: #{disc_block.1} parent=5 // pred_check
      %p467 = pneg %p466
    $region34: #{disc_block.1} parent=5 // pred_check_branch
      %469 = sbr.rel (%p467) target = $region36
    $region35: #{disc_block.1} parent=5 // pred_region
      %s470 = ssub.s32 %s8, 2
      // Predicated region
      $region37: #{disc_block.1} parent=35 // pred_check
        %p471 = pneg %p114
      $region38: #{disc_block.1} parent=35 // pred_check_branch
        %473 = sbr.rel (%p471) target = $region40
      $region39: #{disc_block.1} parent=35 // pred_region
        %p474 = scmp.lt.s32.totalorder %s21, 1
        %s475 = scalar_select %p474, %s21, 1
        %p476 = scmp.lt.s32.totalorder %s22, 0
        %s477 = scalar_select %p476, %s22, 0
        %s478 = smul.addr %s475, 8
        %s479 = sadd.s32 %s477, %s478
        %s480 = smul.addr %s479, 8
        %s481 = scalar_lea.vmem %s2, %s480
      $region40: #{disc_block.1} parent=35 // pred_fallthru
        _
    $region36: #{disc_block.1} parent=5 // pred_fallthru
      _
  $region6: #{disc_block.1} parent=0 // loop_footer
    %s12 = sadd.s32 1, %s8
  $region7: #{disc_block.1} parent=0 // loop_footer_branch
    %7 = sbr.rel target = $region3
  $region8: #{disc_block.1} parent=0 // loop_exit
    _

</llo_original>
